<compile_context>
chip_gen: v7x
topology: tpu7x:2x2x1
jax: 0.10.0
libtpu: 0.0.40
codegen_flags: <defaults>
</compile_context>

<pallas_src>
import functools
import math

import jax
import jax.numpy as jnp
from jax.experimental import pallas as pl
from jax.experimental.pallas import tpu as pltpu


def _round_up(n, m):
    return ((n + m - 1) // m) * m


def _pick_block_rows(r):
    """Lane-dense row-block size: large blocks, but >=2 grid steps when possible
    so the 'parallel' grid axis can shard across v7x's two TensorCores."""
    lane = 128
    rp = _round_up(max(r, 1), lane)
    if rp <= lane:
        return lane
    return min(1024, _round_up((rp + 1) // 2, lane))


def _disc_kernel(L, heads, nbasis, eps,
                 xT_ref, ws_ref, bsc_ref, wmix_ref, colc_ref, sc_ref, o_ref):
    # scalar constants from SMEM
    mean = sc_ref[0]
    inv_std = sc_ref[1]
    c0 = sc_ref[2]
    wlin_sum = sc_ref[3]
    blin = sc_ref[4]

    tr = xT_ref.shape[1]

    # ---- discriminator input normalisation: (x - mean) / std ------------------
    xn = (xT_ref[...] - mean) * inv_std                      # (L, TR) f32

    # ---- Basisformer instance norm over the time axis (sublane reduction) -----
    mean_x = jnp.mean(xn, axis=0, keepdims=True)             # (1, TR)
    ctr = xn - mean_x
    var = jnp.sum(ctr * ctr, axis=0, keepdims=True) * (1.0 / max(L - 1, 1))
    scale = jnp.sqrt(var) + eps                              # (1, TR) de-norm scale
    feat = ctr / scale                                       # exact divide (norm/de-norm cancel)

    # ---- fused coefnet score matmul: (H*N, L) x (L, TR), bf16 in / f32 acc ----
    s = jnp.dot(ws_ref[...], feat.astype(jnp.bfloat16),
                preferred_element_type=jnp.float32) + bsc_ref[...]   # (H*N, TR)

    # ---- per-head softmax over the N basis scores (sublane groups of size N) --
    s3 = s.reshape(heads, nbasis, tr)
    mx = jnp.max(s3, axis=1, keepdims=True)
    p = jnp.exp(s3 - mx)
    den = jnp.sum(p, axis=1, keepdims=True)
    a = (p * pl.reciprocal(den, approx=True)).reshape(heads * nbasis, tr)

    # ---- basis mixing fused with MLP_sy layer 1: (bty, H*N) x (H*N, TR) -------
    hb = jnp.dot(wmix_ref[...], a, preferred_element_type=jnp.float32)  # (bty, TR)
    bs1 = colc_ref[:, 0:1]                                   # (bty, 1)
    wv = colc_ref[:, 1:2]                                    # ws2 @ wlin, (bty, 1)
    hs = jnp.maximum(hb + bs1, 0.0)

    # ---- MLP_sy layer 2 + de-norm + Linear(S, 1), algebraically folded --------
    t = jnp.sum(hs * wv, axis=0, keepdims=True) + c0         # (1, TR)
    logit = scale * t + mean_x * wlin_sum + blin

    # ---- sigmoid + lane-dense (1, TR) output slab ------------------------------
    o_ref[...] = jax.nn.sigmoid(logit)


def make_params(key, in_dim, hidden_dim, d_model=512, heads=8, basis_nums=8, bottle=4):
    """Deterministic synthetic parameters (shapes follow the module's __init__)."""
    L, S, N = in_dim, hidden_dim, basis_nums
    bty = max(S // bottle, 1)

    def xavier(k, shape):
        fan_in, fan_out = shape[0], shape[-1]
        scale = math.sqrt(2.0 / (fan_in + fan_out))
        return scale * jax.random.normal(k, shape, dtype=jnp.float32)

    ks = jax.random.split(key, 16)
    params = (
        xavier(ks[0], (N, L + S)),                  # learnable basis
        xavier(ks[1], (L, d_model)),                # project1 (series -> d_model)
        jnp.zeros((1, d_model), jnp.float32),
        xavier(ks[2], (L, d_model)),                # project2 (basis  -> d_model)
        jnp.zeros((1, d_model), jnp.float32),
        xavier(ks[3], (d_model, d_model)),          # coefnet query proj
        jnp.zeros((1, d_model), jnp.float32),
        xavier(ks[4], (d_model, d_model)),          # coefnet key proj
        jnp.zeros((1, d_model), jnp.float32),
        xavier(ks[5], (S, bty)),                    # MLP_y layer 1
        jnp.zeros((1, bty), jnp.float32),
        xavier(ks[6], (bty, S)),                    # MLP_y layer 2
        jnp.zeros((1, S), jnp.float32),
        xavier(ks[7], (S, bty)),                    # MLP_sy layer 1
        jnp.zeros((1, bty), jnp.float32),
        xavier(ks[8], (bty, S)),                    # MLP_sy layer 2
        jnp.zeros((1, S), jnp.float32),
        xavier(ks[9], (S, 1)),                      # self.linear (xavier_normal_)
        jnp.zeros((1, 1), jnp.float32),
    )
    return params


def discriminator_with_basisformer(x, h_0, c_0, params, *,
                                   mean, std, hidden_dim,
                                   d_model=512, heads=8, eps=1e-5):
    # h_0 / c_0 are legacy LSTM arguments: accepted but unused by the forward pass.
    del h_0, c_0
    B, C, L = x.shape
    S = hidden_dim
    assert d_model % heads == 0 and S % heads == 0

    (basis, wp1, bp1, wp2, bp2, wq, bq, wk, bk,
     wy1, by1, wy2, by2, ws1, bs1, ws2, bs2, wlin, blin) = params
    N = basis.shape[0]
    dh = d_model // heads
    sk = S // heads
    bty = ws1.shape[1]

    # ---- x-independent basis-side precompute (hoisted out of the kernel) ------
    nrm = jnp.sqrt(jnp.sum(basis * basis, axis=-1, keepdims=True))
    m = basis / jnp.maximum(nrm, eps)                  # F.normalize-style
    raw_m1 = m[:, :L]                                  # (N, L) history basis
    raw_m2 = m[:, L:]                                  # (N, S) future  basis
    base_d = raw_m1 @ wp2 + bp2                        # (N, d_model)
    k_pre = base_d @ wk + bk                           # (N, d_model) coefnet keys
    m2 = jax.nn.relu(raw_m2 @ wy1 + by1) @ wy2 + by2   # (N, S) MLP_y(basis)

    # fold project1 @ coefnet-query into one (L, d_model) map, then fold the key
    # side per head into a single (H*N, L) score weight + (H*N,) bias.
    w_fold = wp1 @ wq                                  # (L, d_model)
    b_fold = bp1 @ wq + bq                             # (1, d_model)
    inv_sqrt_dh = 1.0 / math.sqrt(dh)
    k_h = jnp.transpose(k_pre.reshape(N, heads, dh), (1, 2, 0))       # (H, dh, N)
    wf_h = jnp.transpose(w_fold.reshape(L, heads, dh), (1, 0, 2))     # (H, L, dh)
    bf_h = jnp.transpose(b_fold.reshape(1, heads, dh), (1, 0, 2))     # (H, 1, dh)
    w_score = jnp.einsum('hld,hdn->hln', wf_h, k_h) * inv_sqrt_dh     # (H, L, N)
    b_score = jnp.einsum('hxd,hdn->hxn', bf_h, k_h) * inv_sqrt_dh     # (H, 1, N)
    w_score_b = jnp.transpose(w_score, (0, 2, 1)).reshape(
        heads * N, L).astype(jnp.bfloat16)                            # (H*N, L)
    b_score_t = b_score.reshape(heads * N, 1).astype(jnp.float32)     # (H*N, 1)

    # fold per-head basis mixing with MLP_sy layer 1: (bty, H*N)
    m2_h = jnp.transpose(m2.reshape(N, heads, sk), (1, 0, 2))         # (H, N, sk)
    ws1_h = ws1.reshape(heads, sk, bty)                               # (H, sk, bty)
    w_am = jnp.einsum('hnk,hkb->hnb', m2_h, ws1_h)                    # (H, N, bty)
    w_mix_t = jnp.transpose(w_am, (2, 0, 1)).reshape(
        bty, heads * N).astype(jnp.float32)                           # (bty, H*N)

    # fold MLP_sy layer 2 + de-norm + Linear(S, 1) into per-row scalar math
    colc = jnp.concatenate([bs1.reshape(bty, 1),
                            (ws2 @ wlin).reshape(bty, 1)],
                           axis=1).astype(jnp.float32)                # (bty, 2)
    c0 = jnp.dot(bs2.reshape(-1), wlin.reshape(-1))
    wlin_sum = jnp.sum(wlin)
    sconst = jnp.stack([
        jnp.asarray(mean, jnp.float32).reshape(()),
        (1.0 / jnp.asarray(std, jnp.float32)).reshape(()),
        c0.astype(jnp.float32),
        wlin_sum.astype(jnp.float32),
        jnp.asarray(blin, jnp.float32).reshape(()),
    ]).astype(jnp.float32)                                            # (5,) -> SMEM

    # ---- flatten (B, C) into rows; lane-dense transposed (L, R) slab ----------
    R = B * C
    TR = _pick_block_rows(R)
    R_pad = _round_up(max(R, 1), TR)
    x_t = jnp.transpose(x.reshape(R, L).astype(jnp.float32))          # (L, R)
    if R_pad != R:
        x_t = jnp.pad(x_t, ((0, 0), (0, R_pad - R)))

    kernel = functools.partial(_disc_kernel, L, heads, N, float(eps))

    # constant weight blocks use fixed index maps (few KiB total after the folds)
    full = lambda a: pl.BlockSpec(a.shape, lambda i: (0,) * a.ndim)

    out = pl.pallas_call(
        kernel,
        out_shape=jax.ShapeDtypeStruct((1, R_pad), jnp.float32),
        grid=(R_pad // TR,),
        in_specs=[pl.BlockSpec((L, TR), lambda i: (0, i)),
                  full(w_score_b), full(b_score_t), full(w_mix_t), full(colc),
                  pl.BlockSpec(memory_space=pltpu.MemorySpace.SMEM)],
        out_specs=pl.BlockSpec((1, TR), lambda i: (0, i)),
        compiler_params=pltpu.CompilerParams(
            dimension_semantics=("parallel",)),
    )(x_t, w_score_b, b_score_t, w_mix_t, colc, sconst)

    return out[0, :R].reshape(B, C, 1)


if __name__ == "__main__":
    B, C = 2, 4
    in_dim, hidden_dim = 16, 32        # seq_len / pred_len of the Basisformer
    mean, std = 0.5, 2.0

    key = jax.random.PRNGKey(0)
    k_x, k_p = jax.random.split(key)
    x = jax.random.normal(k_x, (B, C, in_dim), dtype=jnp.float32)
    h_0 = jnp.zeros((1, B, hidden_dim), jnp.float32)   # unused (LSTM legacy args)
    c_0 = jnp.zeros((1, B, hidden_dim), jnp.float32)

    params = make_params(k_p, in_dim, hidden_dim)

    out = discriminator_with_basisformer(
        x, h_0, c_0, params, mean=mean, std=std, hidden_dim=hidden_dim)
    out = jax.block_until_ready(out)

    assert out.shape == (B, C, 1)
    assert bool(jnp.all(jnp.isfinite(out)))
    assert bool(jnp.all((out >= 0.0) & (out <= 1.0)))   # sigmoid output range
    print("KERNEL_OK")
</pallas_src>

<mosaic_0001>
module attributes {stable_mosaic.version = 11 : i64} {
  func.func @_disc_kernel(%arg0: i32, %arg1: memref<16x128xf32, #tpu.memory_space<vmem>>, %arg2: memref<64x16xbf16, #tpu.memory_space<vmem>>, %arg3: memref<64x1xf32, #tpu.memory_space<vmem>>, %arg4: memref<8x64xf32, #tpu.memory_space<vmem>>, %arg5: memref<8x2xf32, #tpu.memory_space<vmem>>, %arg6: memref<5xf32, #tpu.memory_space<smem>>, %arg7: memref<1x128xf32, #tpu.memory_space<vmem>>) attributes {dimension_semantics = [#tpu.dimension_semantics<parallel>], iteration_bounds = array<i64: 1>, scalar_prefetch = 0 : i64, scratch_operands = 0 : i64, tpu.core_type = #tpu.core_type<tc>, window_params = [{transform_indices = @transform_0, window_bounds = array<i64: 16, 128>}, {pipeline_mode = #tpu.pipeline_mode<synchronous>, transform_indices = @transform_1, window_bounds = array<i64: 64, 16>}, {pipeline_mode = #tpu.pipeline_mode<synchronous>, transform_indices = @transform_2, window_bounds = array<i64: 64, 1>}, {pipeline_mode = #tpu.pipeline_mode<synchronous>, transform_indices = @transform_3, window_bounds = array<i64: 8, 64>}, {pipeline_mode = #tpu.pipeline_mode<synchronous>, transform_indices = @transform_4, window_bounds = array<i64: 8, 2>}, {transform_indices = @transform_5, window_bounds = array<i64: 5>}, {transform_indices = @transform_6, window_bounds = array<i64: 1, 128>}]} {
    %c0 = arith.constant 0 : index
    %0 = memref.load %arg6[%c0] : memref<5xf32, #tpu.memory_space<smem>>
    %c1 = arith.constant 1 : index
    %1 = memref.load %arg6[%c1] : memref<5xf32, #tpu.memory_space<smem>>
    %c2 = arith.constant 2 : index
    %2 = memref.load %arg6[%c2] : memref<5xf32, #tpu.memory_space<smem>>
    %c3 = arith.constant 3 : index
    %3 = memref.load %arg6[%c3] : memref<5xf32, #tpu.memory_space<smem>>
    %c4 = arith.constant 4 : index
    %4 = memref.load %arg6[%c4] : memref<5xf32, #tpu.memory_space<smem>>
    %c0_0 = arith.constant 0 : index
    %c0_1 = arith.constant 0 : index
    %5 = vector.load %arg1[%c0_0, %c0_1] : memref<16x128xf32, #tpu.memory_space<vmem>>, vector<16x128xf32>
    %6 = vector.broadcast %0 : f32 to vector<16x128xf32>
    %7 = arith.subf %5, %6 : vector<16x128xf32>
    %8 = vector.broadcast %1 : f32 to vector<16x128xf32>
    %9 = arith.mulf %7, %8 : vector<16x128xf32>
    %cst = arith.constant dense<0.000000e+00> : vector<128xf32>
    %10 = vector.multi_reduction <add>, %9, %cst [0] : vector<16x128xf32> to vector<128xf32>
    %11 = vector.shape_cast %10 : vector<128xf32> to vector<1x128xf32>
    %cst_2 = arith.constant 1.600000e+01 : f32
    %12 = vector.broadcast %cst_2 : f32 to vector<1x128xf32>
    %13 = arith.divf %11, %12 : vector<1x128xf32>
    %14 = vector.broadcast %13 : vector<1x128xf32> to vector<16x128xf32>
    %15 = arith.subf %9, %14 : vector<16x128xf32>
    %16 = arith.mulf %15, %15 : vector<16x128xf32>
    %cst_3 = arith.constant dense<0.000000e+00> : vector<128xf32>
    %17 = vector.multi_reduction <add>, %16, %cst_3 [0] : vector<16x128xf32> to vector<128xf32>
    %18 = vector.shape_cast %17 : vector<128xf32> to vector<1x128xf32>
    %cst_4 = arith.constant 0.0666666701 : f32
    %19 = vector.broadcast %cst_4 : f32 to vector<1x128xf32>
    %20 = arith.mulf %18, %19 : vector<1x128xf32>
    %21 = math.sqrt %20 : vector<1x128xf32>
    %cst_5 = arith.constant 9.99999974E-6 : f32
    %22 = vector.broadcast %cst_5 : f32 to vector<1x128xf32>
    %23 = arith.addf %21, %22 : vector<1x128xf32>
    %24 = vector.broadcast %23 : vector<1x128xf32> to vector<16x128xf32>
    %25 = arith.divf %15, %24 : vector<16x128xf32>
    %c0_6 = arith.constant 0 : index
    %c0_7 = arith.constant 0 : index
    %26 = vector.load %arg2[%c0_6, %c0_7] : memref<64x16xbf16, #tpu.memory_space<vmem>>, vector<64x16xbf16>
    %27 = arith.truncf %25 : vector<16x128xf32> to vector<16x128xbf16>
    %cst_8 = arith.constant dense<0.000000e+00> : vector<64x128xf32>
    %28 = tpu.matmul %26, %27, %cst_8 {dimension_numbers = #tpu.dot_dimension_numbers<[1], [0], [0], [1], [0, 0, 1, 1], [], []>} : vector<64x16xbf16>, vector<16x128xbf16>, vector<64x128xf32> -> vector<64x128xf32>
    %c0_9 = arith.constant 0 : index
    %c0_10 = arith.constant 0 : index
    %29 = vector.load %arg3[%c0_9, %c0_10] : memref<64x1xf32, #tpu.memory_space<vmem>>, vector<64x1xf32>
    %30 = vector.broadcast %29 : vector<64x1xf32> to vector<64x128xf32>
    %31 = arith.addf %28, %30 : vector<64x128xf32>
    %32 = vector.shape_cast %31 : vector<64x128xf32> to vector<8x8x128xf32>
    %cst_11 = arith.constant dense<0xFF800000> : vector<8x128xf32>
    %33 = vector.multi_reduction <maximumf>, %32, %cst_11 [1] : vector<8x8x128xf32> to vector<8x128xf32>
    %34 = vector.shape_cast %33 : vector<8x128xf32> to vector<8x1x128xf32>
    %35 = vector.broadcast %34 : vector<8x1x128xf32> to vector<8x8x128xf32>
    %36 = arith.subf %32, %35 : vector<8x8x128xf32>
    %37 = math.exp %36 : vector<8x8x128xf32>
    %cst_12 = arith.constant dense<0.000000e+00> : vector<8x128xf32>
    %38 = vector.multi_reduction <add>, %37, %cst_12 [1] : vector<8x8x128xf32> to vector<8x128xf32>
    %39 = vector.shape_cast %38 : vector<8x128xf32> to vector<8x1x128xf32>
    %40 = tpu.reciprocal %39 {approx = true} : vector<8x1x128xf32> -> vector<8x1x128xf32>
    %41 = vector.broadcast %40 : vector<8x1x128xf32> to vector<8x8x128xf32>
    %42 = arith.mulf %37, %41 : vector<8x8x128xf32>
    %43 = vector.shape_cast %42 : vector<8x8x128xf32> to vector<64x128xf32>
    %c0_13 = arith.constant 0 : index
    %c0_14 = arith.constant 0 : index
    %44 = vector.load %arg4[%c0_13, %c0_14] : memref<8x64xf32, #tpu.memory_space<vmem>>, vector<8x64xf32>
    %cst_15 = arith.constant dense<0.000000e+00> : vector<8x128xf32>
    %45 = tpu.matmul %44, %43, %cst_15 {dimension_numbers = #tpu.dot_dimension_numbers<[1], [0], [0], [1], [0, 0, 1, 1], [], []>} : vector<8x64xf32>, vector<64x128xf32>, vector<8x128xf32> -> vector<8x128xf32>
    %c0_16 = arith.constant 0 : index
    %c0_17 = arith.constant 0 : index
    %46 = vector.load %arg5[%c0_16, %c0_17] : memref<8x2xf32, #tpu.memory_space<vmem>>, vector<8x1xf32>
    %c0_18 = arith.constant 0 : index
    %c1_19 = arith.constant 1 : index
    %47 = vector.load %arg5[%c0_18, %c1_19] : memref<8x2xf32, #tpu.memory_space<vmem>>, vector<8x1xf32>
    %48 = vector.broadcast %46 : vector<8x1xf32> to vector<8x128xf32>
    %49 = arith.addf %45, %48 : vector<8x128xf32>
    %cst_20 = arith.constant 0.000000e+00 : f32
    %50 = vector.broadcast %cst_20 : f32 to vector<8x128xf32>
    %51 = arith.maximumf %49, %50 : vector<8x128xf32>
    %52 = vector.broadcast %47 : vector<8x1xf32> to vector<8x128xf32>
    %53 = arith.mulf %51, %52 : vector<8x128xf32>
    %cst_21 = arith.constant dense<0.000000e+00> : vector<128xf32>
    %54 = vector.multi_reduction <add>, %53, %cst_21 [0] : vector<8x128xf32> to vector<128xf32>
    %55 = vector.shape_cast %54 : vector<128xf32> to vector<1x128xf32>
    %56 = vector.broadcast %2 : f32 to vector<1x128xf32>
    %57 = arith.addf %55, %56 : vector<1x128xf32>
    %58 = arith.mulf %23, %57 : vector<1x128xf32>
    %59 = vector.broadcast %3 : f32 to vector<1x128xf32>
    %60 = arith.mulf %13, %59 : vector<1x128xf32>
    %61 = arith.addf %58, %60 : vector<1x128xf32>
    %62 = vector.broadcast %4 : f32 to vector<1x128xf32>
    %63 = arith.addf %61, %62 : vector<1x128xf32>
    %64 = arith.negf %63 : vector<1x128xf32>
    %65 = math.exp %64 : vector<1x128xf32>
    %cst_22 = arith.constant 1.000000e+00 : f32
    %66 = vector.broadcast %cst_22 : f32 to vector<1x128xf32>
    %67 = arith.addf %66, %65 : vector<1x128xf32>
    %68 = arith.divf %66, %67 : vector<1x128xf32>
    %c0_23 = arith.constant 0 : index
    %c0_24 = arith.constant 0 : index
    %69 = vector.load %arg7[%c0_23, %c0_24] : memref<1x128xf32, #tpu.memory_space<vmem>>, vector<1x128xf32>
    tpu.vector_store %arg7[%c0_23, %c0_24], %68 {strides = array<i32>} : memref<1x128xf32, #tpu.memory_space<vmem>>, vector<1x128xf32>,
    return
  }
  func.func @transform_0(%arg0: i32) -> (i32, i32) {
    %c0_i32 = arith.constant 0 : i32
    %c0_i32_0 = arith.constant 0 : i32
    return %c0_i32, %arg0 : i32, i32
  }
  func.func @transform_1(%arg0: i32) -> (i32, i32) {
    %c0_i32 = arith.constant 0 : i32
    %c0_i32_0 = arith.constant 0 : i32
    %c0_i32_1 = arith.constant 0 : i32
    return %c0_i32, %c0_i32_0 : i32, i32
  }
  func.func @transform_2(%arg0: i32) -> (i32, i32) {
    %c0_i32 = arith.constant 0 : i32
    %c0_i32_0 = arith.constant 0 : i32
    %c0_i32_1 = arith.constant 0 : i32
    return %c0_i32, %c0_i32_0 : i32, i32
  }
  func.func @transform_3(%arg0: i32) -> (i32, i32) {
    %c0_i32 = arith.constant 0 : i32
    %c0_i32_0 = arith.constant 0 : i32
    %c0_i32_1 = arith.constant 0 : i32
    return %c0_i32, %c0_i32_0 : i32, i32
  }
  func.func @transform_4(%arg0: i32) -> (i32, i32) {
    %c0_i32 = arith.constant 0 : i32
    %c0_i32_0 = arith.constant 0 : i32
    %c0_i32_1 = arith.constant 0 : i32
    return %c0_i32, %c0_i32_0 : i32, i32
  }
  func.func @transform_5(%arg0: i32) -> i32 {
    %c0_i32 = arith.constant 0 : i32
    %c0_i32_0 = arith.constant 0 : i32
    return %c0_i32 : i32
  }
  func.func @transform_6(%arg0: i32) -> (i32, i32) {
    %c0_i32 = arith.constant 0 : i32
    %c0_i32_0 = arith.constant 0 : i32
    return %c0_i32, %arg0 : i32, i32
  }
}

</mosaic_0001>

<llo_original>
// kernel: tpu_custom_call.1
$region0: #{tpu_custom_call.1}
  #allocation0 [shape = 'u32[]', space=smem, size = 0x4, offset = 0x4, fixed_abs, tag = 'smem constant byte address 0x4 - core index']
  #allocation1 [shape = 'u32[144,128]{1,0:T(1,128)}', space=vmem, size = 0x12000, scoped, tag = 'internal scratch']
  %s0 = inlined_call_operand.vmem [shape: f32[16,128], index: 0, kind: input, shape index: {}]
  %s1 = inlined_call_operand.vmem [shape: bf16[64,16], index: 1, kind: input, shape index: {}]
  %s2 = inlined_call_operand.vmem [shape: f32[64,1], index: 2, kind: input, shape index: {}]
  %s3 = inlined_call_operand.vmem [shape: f32[8,64], index: 3, kind: input, shape index: {}]
  %s4 = inlined_call_operand.vmem [shape: f32[8,2], index: 4, kind: input, shape index: {}]
  %s5 = inlined_call_operand.vmem [shape: f32[5], index: 5, kind: input, shape index: {}]
  %s6 = inlined_call_operand.hbm [shape: f32[1,128], index: 6, kind: output, shape index: {}]
  %s7 = sld [smem:[#allocation0]]
  $region38: #{tpu_custom_call.1} parent=0
    _
  %s9 = ssub.s32 1, %s7
  %s10 = scalar_select 0, %s9, %s7
  $region1: #{tpu_custom_call.1} parent=0
    #allocation2 [shape = 'u8[512]{0}', space=smem, size = 0x200, scoped, tag = 'input window, operand 5, single buffered']
    #allocation3 [shape = 's32[1]{0}', space=sflag, size = 0x4, scoped, tag = 'scoped memory for tpu_custom_call.1']
    #allocation4 [shape = 's32[1]{0}', space=sflag, size = 0x4, scoped, tag = 'scoped memory for tpu_custom_call.1']
    #allocation5 [shape = 'u8[512]{0}', space=vmem, size = 0x400, scoped, tag = 'output window, operand 0, single buffered']
    %11 = vsyncpa [#allocation4], 0
    %12 = vsyncpa [#allocation3], 0
    // Predicated region
    $region2: #{tpu_custom_call.1} parent=1 // pred_check
      _
    $region3: #{tpu_custom_call.1} parent=1 // pred_check_branch
      %14 = sbr.rel (0) target = $region5
    $region4: #{tpu_custom_call.1} parent=1 // pred_region
      _
    $region5: #{tpu_custom_call.1} parent=1 // pred_fallthru
      _
    // Predicated region
    $region6: #{tpu_custom_call.1} parent=1 // pred_check
      _
    $region7: #{tpu_custom_call.1} parent=1 // pred_check_branch
      %16 = sbr.rel (0) target = $region9
    $region8: #{tpu_custom_call.1} parent=1 // pred_region
      _
    $region9: #{tpu_custom_call.1} parent=1 // pred_fallthru
      _
    // Predicated region
    $region10: #{tpu_custom_call.1} parent=1 // pred_check
      _
    $region11: #{tpu_custom_call.1} parent=1 // pred_check_branch
      %18 = sbr.rel (0) target = $region13
    $region12: #{tpu_custom_call.1} parent=1 // pred_region
      _
    $region13: #{tpu_custom_call.1} parent=1 // pred_fallthru
      _
    // Predicated region
    $region14: #{tpu_custom_call.1} parent=1 // pred_check
      _
    $region15: #{tpu_custom_call.1} parent=1 // pred_check_branch
      %20 = sbr.rel (0) target = $region17
    $region16: #{tpu_custom_call.1} parent=1 // pred_region
      _
    $region17: #{tpu_custom_call.1} parent=1 // pred_fallthru
      _
    // Predicated region
    $region18: #{tpu_custom_call.1} parent=1 // pred_check
      _
    $region19: #{tpu_custom_call.1} parent=1 // pred_check_branch
      %22 = sbr.rel (0) target = $region21
    $region20: #{tpu_custom_call.1} parent=1 // pred_region
      _
    $region21: #{tpu_custom_call.1} parent=1 // pred_fallthru
      _
    // Predicated region
    $region22: #{tpu_custom_call.1} parent=1 // pred_check
      _
    $region23: #{tpu_custom_call.1} parent=1 // pred_check_branch
      %24 = sbr.rel (0) target = $region25
    $region24: #{tpu_custom_call.1} parent=1 // pred_region
      %s26 = ssub.s32 16, 16
      %27 = vsyncadd [#allocation4], %s26
      %s29 = sshll.u32 %s5, 4
      %s30 = int_to_ptr.vmem [resolvable:$true] %s29
      %32 = dma.vmem_to_smem %s30, 16, [#allocation2], [#allocation4]
    $region25: #{tpu_custom_call.1} parent=1 // pred_fallthru
      _
    // Predicated region
    $region26: #{tpu_custom_call.1} parent=1 // pred_check
      _
    $region27: #{tpu_custom_call.1} parent=1 // pred_check_branch
      %34 = sbr.rel (0) target = $region29
    $region28: #{tpu_custom_call.1} parent=1 // pred_region
      %35 = dma.done [#allocation4], 16
    $region29: #{tpu_custom_call.1} parent=1 // pred_fallthru
      _
    %36 = sfence
    %s38 = sld [smem:[#allocation2]]
    %s39 = sld [smem:[#allocation2 + $0x1]]
    %s40 = sld [smem:[#allocation2 + $0x2]]
    %s41 = sld [smem:[#allocation2 + $0x3]]
    %s42 = sld [smem:[#allocation2 + $0x4]]
    %v43 = vld [vmem:[%s0] sm:$0xff]
    %v44 = vld [vmem:[%s0 + $0x8] sm:$0xff]
    %v45 = vstv %s38
    %v46 = vsub.f32 %v43, %v45
    %v47 = vsub.f32 %v44, %v45
    %v48 = vstv %s39
    %v49 = vmul.f32 %v46, %v48
    %v50 = vmul.f32 %v47, %v48
    %v51 = vadd.f32 %v49, %v50
    %v52 = vrot.slane %v51, 4
    %v53 = vadd.f32 %v51, %v52
    %v54 = vrot.slane %v53, 2
    %v55 = vadd.f32 %v53, %v54
    %v56 = vrot.slane %v55, 1
    %v57 = vadd.f32 %v55, %v56
    %v58 = vrcp.pop 16.0
    %v59 = vmul.f32 %v57, %v58
    %v60 = vsub.f32 %v49, %v59
    %v61 = vsub.f32 %v50, %v59
    %v62 = vmul.f32 %v60, %v60
    %v63 = vmul.f32 %v61, %v61
    %v64 = vadd.f32 %v62, %v63
    %v65 = vrot.slane %v64, 4
    %v66 = vadd.f32 %v64, %v65
    %v67 = vrot.slane %v66, 2
    %v68 = vadd.f32 %v66, %v67
    %v69 = vrot.slane %v68, 1
    %v70 = vadd.f32 %v68, %v69
    %v71 = vmul.f32 %v70, 0.06666667
    %v72 = vrsqrt.pop %v71
    %v73 = vmul.f32 %v71, %v72
    %vm74 = vcmp.eq.f32.partialorder %v71, inf
    %v75 = vsel %vm74, %v71, %v73
    %vm76 = vcmp.eq.f32.partialorder %v71, 0.0
    %v77 = vand.u32 %v71, 2147483648
    %v78 = vsel %vm76, %v77, %v75
    %v79 = vadd.f32 %v78, 1e-05
    %v80 = vrcp.pop %v79
    %v81 = vmul.f32 %v60, %v80
    %v82 = vmul.f32 %v61, %v80
    %v83 = vld [vmem:[%s1] sm:$0xf]
    %v84 = vld [vmem:[%s1 + $0x4] sm:$0xf]
    %v85 = vld [vmem:[%s1 + $0x8] sm:$0xf]
    %v86 = vld [vmem:[%s1 + $0xc] sm:$0xf]
    %v87 = vld [vmem:[%s1 + $0x10] sm:$0xf]
    %v88 = vld [vmem:[%s1 + $0x14] sm:$0xf]
    %v89 = vld [vmem:[%s1 + $0x18] sm:$0xf]
    %v90 = vld [vmem:[%s1 + $0x1c] sm:$0xf]
    %v91 = vpack.c.bf16 %v82, %v81
    %v92 = vld [vmem:[%s2] sm:$0xff]
    %v93 = vld [vmem:[%s2 + $0x8] sm:$0xff]
    %v94 = vld [vmem:[%s2 + $0x10] sm:$0xff]
    %v95 = vld [vmem:[%s2 + $0x18] sm:$0xff]
    %v96 = vld [vmem:[%s2 + $0x20] sm:$0xff]
    %v97 = vld [vmem:[%s2 + $0x28] sm:$0xff]
    %v98 = vld [vmem:[%s2 + $0x30] sm:$0xff]
    %v99 = vld [vmem:[%s2 + $0x38] sm:$0xff]
    %101 = vset.pattern.permute.xlu0 0
    %102 = vperm.xlu0 %101, %v92
    %v103 = vpop.permute.xlu0 %102
    %106 = vset.pattern.permute.xlu0 0
    %107 = vperm.xlu0 %106, %v93
    %v108 = vpop.permute.xlu0 %107
    %111 = vset.pattern.permute.xlu0 0
    %112 = vperm.xlu0 %111, %v94
    %v113 = vpop.permute.xlu0 %112
    %116 = vset.pattern.permute.xlu0 0
    %117 = vperm.xlu0 %116, %v95
    %v118 = vpop.permute.xlu0 %117
    %121 = vset.pattern.permute.xlu0 0
    %122 = vperm.xlu0 %121, %v96
    %v123 = vpop.permute.xlu0 %122
    %126 = vset.pattern.permute.xlu0 0
    %127 = vperm.xlu0 %126, %v97
    %v128 = vpop.permute.xlu0 %127
    %131 = vset.pattern.permute.xlu0 0
    %132 = vperm.xlu0 %131, %v98
    %v133 = vpop.permute.xlu0 %132
    %136 = vset.pattern.permute.xlu0 0
    %137 = vperm.xlu0 %136, %v99
    %v138 = vpop.permute.xlu0 %137
    %v148 = vunpack.c.l.b16 %v83
    %v149 = vunpack.c.l.b16 %v84
    %v150 = vunpack.c.l.b16 %v85
    %v151 = vunpack.c.l.b16 %v86
    %v152 = vunpack.c.l.b16 %v87
    %v153 = vunpack.c.l.b16 %v88
    %v154 = vunpack.c.l.b16 %v89
    %v155 = vunpack.c.l.b16 %v90
    %v156 = vpack.c.b16 %v149, %v148
    %v157 = vpack.c.b16 %v151, %v150
    %v158 = vpack.c.b16 %v153, %v152
    %v159 = vpack.c.b16 %v155, %v154
    %vm160 = vcmask 130048
    %v162 = vsel %vm160, %v156, 0
    %v165 = vsel %vm160, %v157, 0
    %v168 = vsel %vm160, %v158, 0
    %v171 = vsel %vm160, %v159, 0
    %173 = vmatprep.subr.bf16.mxu0 0
    %174 = vmatpush1.bf16.msra.mxu0 %v91
    %175 = vmatprep.subr.bf16.mxu0 0
    %176 = vmatpush1.bf16.msra.mxu0 0
    %177 = vmatprep.subr.bf16.mxu0 0
    %178 = vmatpush1.bf16.msra.mxu0 0
    %179 = vmatprep.subr.bf16.mxu0 0
    %180 = vmatpush1.bf16.msra.mxu0 0
    %181 = vmatprep.subr.bf16.mxu0 0
    %182 = vmatpush1.bf16.msra.mxu0 0
    %183 = vmatprep.subr.bf16.mxu0 0
    %184 = vmatpush1.bf16.msra.mxu0 0
    %185 = vmatprep.subr.bf16.mxu0 0
    %186 = vmatpush1.bf16.msra.mxu0 0
    %187 = vmatprep.subr.bf16.mxu0 0
    %188 = vmatpush1.bf16.msra.mxu0 0
    %189 = vmatprep.subr.bf16.mxu0 0
    %190 = vmatpush1.bf16.msra.mxu0 0
    %191 = vmatprep.subr.bf16.mxu0 0
    %192 = vmatpush1.bf16.msra.mxu0 0
    %193 = vmatprep.subr.bf16.mxu0 0
    %194 = vmatpush1.bf16.msra.mxu0 0
    %195 = vmatprep.subr.bf16.mxu0 0
    %196 = vmatpush1.bf16.msra.mxu0 0
    %197 = vmatprep.subr.bf16.mxu0 0
    %198 = vmatpush1.bf16.msra.mxu0 0
    %199 = vmatprep.subr.bf16.mxu0 0
    %200 = vmatpush1.bf16.msra.mxu0 0
    %201 = vmatprep.subr.bf16.mxu0 0
    %202 = vmatpush1.bf16.msra.mxu0 0
    %203 = vmatprep.subr.bf16.mxu0 0
    %204 = vmatpush1.bf16.msra.mxu0 0
    %205 = vmatprep.mubr.bf16.mxu0 0
    %206 = vmatmul.mubr.bf16.gmra.mrb[0].mxu0 %v162
    %v207 = vpop.f32.mrb[0].mxu0
    %v208 = vadd.f32 %v103, %v207
    %v209 = vpop.f32.mrb[0].mxu0
    %v210 = vpop.f32.mrb[0].mxu0
    %v211 = vadd.f32 %v108, %v210
    %v212 = vpop.f32.mrb[0].mxu0
    %213 = vmatprep.mubr.bf16.mxu0 0
    %214 = vmatmul.mubr.bf16.gmra.mrb[0].mxu0 %v165
    %v215 = vpop.f32.mrb[0].mxu0
    %v216 = vadd.f32 %v113, %v215
    %v217 = vpop.f32.mrb[0].mxu0
    %v218 = vpop.f32.mrb[0].mxu0
    %v219 = vadd.f32 %v118, %v218
    %v220 = vpop.f32.mrb[0].mxu0
    %221 = vmatprep.mubr.bf16.mxu0 0
    %222 = vmatmul.mubr.bf16.gmra.mrb[0].mxu0 %v168
    %v223 = vpop.f32.mrb[0].mxu0
    %v224 = vadd.f32 %v123, %v223
    %v225 = vpop.f32.mrb[0].mxu0
    %v226 = vpop.f32.mrb[0].mxu0
    %v227 = vadd.f32 %v128, %v226
    %v228 = vpop.f32.mrb[0].mxu0
    %229 = vmatprep.mubr.bf16.mxu0 0
    %230 = vmatmul.mubr.bf16.gmra.mrb[0].mxu0 %v171
    %v231 = vpop.f32.mrb[0].mxu0
    %v232 = vadd.f32 %v133, %v231
    %v233 = vpop.f32.mrb[0].mxu0
    %v234 = vpop.f32.mrb[0].mxu0
    %v235 = vadd.f32 %v138, %v234
    %v236 = vpop.f32.mrb[0].mxu0
    %237 = vdwg.mxu0
    %v238 = vrot.slane %v208, 4
    %v239 = vmax.f32 %v208, %v238
    %v240 = vrot.slane %v239, 2
    %v241 = vmax.f32 %v239, %v240
    %v242 = vrot.slane %v241, 1
    %v243 = vmax.f32 %v241, %v242
    %v244 = vrot.slane %v211, 4
    %v245 = vmax.f32 %v211, %v244
    %v246 = vrot.slane %v245, 2
    %v247 = vmax.f32 %v245, %v246
    %v248 = vrot.slane %v247, 1
    %v249 = vmax.f32 %v247, %v248
    %v250 = vrot.slane %v216, 4
    %v251 = vmax.f32 %v216, %v250
    %v252 = vrot.slane %v251, 2
    %v253 = vmax.f32 %v251, %v252
    %v254 = vrot.slane %v253, 1
    %v255 = vmax.f32 %v253, %v254
    %v256 = vrot.slane %v219, 4
    %v257 = vmax.f32 %v219, %v256
    %v258 = vrot.slane %v257, 2
    %v259 = vmax.f32 %v257, %v258
    %v260 = vrot.slane %v259, 1
    %v261 = vmax.f32 %v259, %v260
    %v262 = vrot.slane %v224, 4
    %v263 = vmax.f32 %v224, %v262
    %v264 = vrot.slane %v263, 2
    %v265 = vmax.f32 %v263, %v264
    %v266 = vrot.slane %v265, 1
    %v267 = vmax.f32 %v265, %v266
    %v268 = vrot.slane %v227, 4
    %v269 = vmax.f32 %v227, %v268
    %v270 = vrot.slane %v269, 2
    %v271 = vmax.f32 %v269, %v270
    %v272 = vrot.slane %v271, 1
    %v273 = vmax.f32 %v271, %v272
    %v274 = vrot.slane %v232, 4
    %v275 = vmax.f32 %v232, %v274
    %v276 = vrot.slane %v275, 2
    %v277 = vmax.f32 %v275, %v276
    %v278 = vrot.slane %v277, 1
    %v279 = vmax.f32 %v277, %v278
    %v280 = vrot.slane %v235, 4
    %v281 = vmax.f32 %v235, %v280
    %v282 = vrot.slane %v281, 2
    %v283 = vmax.f32 %v281, %v282
    %v284 = vrot.slane %v283, 1
    %v285 = vmax.f32 %v283, %v284
    %v286 = vsub.f32 %v208, %v243
    %v287 = vsub.f32 %v211, %v249
    %v288 = vsub.f32 %v216, %v255
    %v289 = vsub.f32 %v219, %v261
    %v290 = vsub.f32 %v224, %v267
    %v291 = vsub.f32 %v227, %v273
    %v292 = vsub.f32 %v232, %v279
    %v293 = vsub.f32 %v235, %v285
    %v294 = vmul.f32 %v286, 1.442695
    %v295 = vpow.pop %v294
    %v296 = vmul.f32 %v287, 1.442695
    %v297 = vpow.pop %v296
    %v298 = vmul.f32 %v288, 1.442695
    %v299 = vpow.pop %v298
    %v300 = vmul.f32 %v289, 1.442695
    %v301 = vpow.pop %v300
    %v302 = vmul.f32 %v290, 1.442695
    %v303 = vpow.pop %v302
    %v304 = vmul.f32 %v291, 1.442695
    %v305 = vpow.pop %v304
    %v306 = vmul.f32 %v292, 1.442695
    %v307 = vpow.pop %v306
    %v308 = vmul.f32 %v293, 1.442695
    %v309 = vpow.pop %v308
    %v310 = vrot.slane %v295, 4
    %v311 = vadd.f32 %v295, %v310
    %v312 = vrot.slane %v311, 2
    %v313 = vadd.f32 %v311, %v312
    %v314 = vrot.slane %v313, 1
    %v315 = vadd.f32 %v313, %v314
    %v316 = vrot.slane %v297, 4
    %v317 = vadd.f32 %v297, %v316
    %v318 = vrot.slane %v317, 2
    %v319 = vadd.f32 %v317, %v318
    %v320 = vrot.slane %v319, 1
    %v321 = vadd.f32 %v319, %v320
    %v322 = vrot.slane %v299, 4
    %v323 = vadd.f32 %v299, %v322
    %v324 = vrot.slane %v323, 2
    %v325 = vadd.f32 %v323, %v324
    %v326 = vrot.slane %v325, 1
    %v327 = vadd.f32 %v325, %v326
    %v328 = vrot.slane %v301, 4
    %v329 = vadd.f32 %v301, %v328
    %v330 = vrot.slane %v329, 2
    %v331 = vadd.f32 %v329, %v330
    %v332 = vrot.slane %v331, 1
    %v333 = vadd.f32 %v331, %v332
    %v334 = vrot.slane %v303, 4
    %v335 = vadd.f32 %v303, %v334
    %v336 = vrot.slane %v335, 2
    %v337 = vadd.f32 %v335, %v336
    %v338 = vrot.slane %v337, 1
    %v339 = vadd.f32 %v337, %v338
    %v340 = vrot.slane %v305, 4
    %v341 = vadd.f32 %v305, %v340
    %v342 = vrot.slane %v341, 2
    %v343 = vadd.f32 %v341, %v342
    %v344 = vrot.slane %v343, 1
    %v345 = vadd.f32 %v343, %v344
    %v346 = vrot.slane %v307, 4
    %v347 = vadd.f32 %v307, %v346
    %v348 = vrot.slane %v347, 2
    %v349 = vadd.f32 %v347, %v348
    %v350 = vrot.slane %v349, 1
    %v351 = vadd.f32 %v349, %v350
    %v352 = vrot.slane %v309, 4
    %v353 = vadd.f32 %v309, %v352
    %v354 = vrot.slane %v353, 2
    %v355 = vadd.f32 %v353, %v354
    %v356 = vrot.slane %v355, 1
    %v357 = vadd.f32 %v355, %v356
    %v358 = vrcp.pop %v315
    %v359 = vrcp.pop %v321
    %v360 = vrcp.pop %v327
    %v361 = vrcp.pop %v333
    %v362 = vrcp.pop %v339
    %v363 = vrcp.pop %v345
    %v364 = vrcp.pop %v351
    %v365 = vrcp.pop %v357
    %v366 = vmul.f32 %v295, %v358
    %v367 = vmul.f32 %v297, %v359
    %v368 = vmul.f32 %v299, %v360
    %v369 = vmul.f32 %v301, %v361
    %v370 = vmul.f32 %v303, %v362
    %v371 = vmul.f32 %v305, %v363
    %v372 = vmul.f32 %v307, %v364
    %v373 = vmul.f32 %v309, %v365
    %v374 = vld [vmem:[%s3] sm:$0xff]
    %v375 = vld [vmem:[%s4] sm:$0xff]
    %377 = vset.pattern.permute.xlu0 0
    %378 = vperm.xlu0 %377, %v375
    %v379 = vpop.permute.xlu0 %378
    %vm381 = vcmask 523264
    %v383 = vsel %vm381, %v374, 0
    %385 = vmatprep.subr.mxu0 0.0
    %386 = vmatpush1.msra.mxu0 %v366
    %387 = vmatprep.subr.mxu0 0.0
    %388 = vmatpush1.msra.mxu0 %v367
    %389 = vmatprep.subr.mxu0 0.0
    %390 = vmatpush1.msra.mxu0 %v368
    %391 = vmatprep.subr.mxu0 0.0
    %392 = vmatpush1.msra.mxu0 %v369
    %393 = vmatprep.subr.mxu0 0.0
    %394 = vmatpush1.msra.mxu0 %v370
    %395 = vmatprep.subr.mxu0 0.0
    %396 = vmatpush1.msra.mxu0 %v371
    %397 = vmatprep.subr.mxu0 0.0
    %398 = vmatpush1.msra.mxu0 %v372
    %399 = vmatprep.subr.mxu0 0.0
    %400 = vmatpush1.msra.mxu0 %v373
    %401 = vmatprep.subr.mxu0 0.0
    %402 = vmatpush1.msra.mxu0 0.0
    %403 = vmatprep.subr.mxu0 0.0
    %404 = vmatpush1.msra.mxu0 0.0
    %405 = vmatprep.subr.mxu0 0.0
    %406 = vmatpush1.msra.mxu0 0.0
    %407 = vmatprep.subr.mxu0 0.0
    %408 = vmatpush1.msra.mxu0 0.0
    %409 = vmatprep.subr.mxu0 0.0
    %410 = vmatpush1.msra.mxu0 0.0
    %411 = vmatprep.subr.mxu0 0.0
    %412 = vmatpush1.msra.mxu0 0.0
    %413 = vmatprep.subr.mxu0 0.0
    %414 = vmatpush1.msra.mxu0 0.0
    %415 = vmatprep.subr.mxu0 0.0
    %416 = vmatpush1.msra.mxu0 0.0
    %417 = vmatprep.subr.mxu0 0.0
    %418 = vmatpush1.msra.mxu0 0.0
    %419 = vmatprep.subr.mxu0 0.0
    %420 = vmatpush1.msra.mxu0 0.0
    %421 = vmatprep.subr.mxu0 0.0
    %422 = vmatpush1.msra.mxu0 0.0
    %423 = vmatprep.subr.mxu0 0.0
    %424 = vmatpush1.msra.mxu0 0.0
    %425 = vmatprep.subr.mxu0 0.0
    %426 = vmatpush1.msra.mxu0 0.0
    %427 = vmatprep.subr.mxu0 0.0
    %428 = vmatpush1.msra.mxu0 0.0
    %429 = vmatprep.subr.mxu0 0.0
    %430 = vmatpush1.msra.mxu0 0.0
    %431 = vmatprep.subr.mxu0 0.0
    %432 = vmatpush1.msra.mxu0 0.0
    %433 = vmatprep.subr.mxu0 0.0
    %434 = vmatpush1.msra.mxu0 0.0
    %435 = vmatprep.subr.mxu0 0.0
    %436 = vmatpush1.msra.mxu0 0.0
    %437 = vmatprep.subr.mxu0 0.0
    %438 = vmatpush1.msra.mxu0 0.0
    %439 = vmatprep.subr.mxu0 0.0
    %440 = vmatpush1.msra.mxu0 0.0
    %441 = vmatprep.subr.mxu0 0.0
    %442 = vmatpush1.msra.mxu0 0.0
    %443 = vmatprep.subr.mxu0 0.0
    %444 = vmatpush1.msra.mxu0 0.0
    %445 = vmatprep.subr.mxu0 0.0
    %446 = vmatpush1.msra.mxu0 0.0
    %447 = vmatprep.subr.mxu0 0.0
    %448 = vmatpush1.msra.mxu0 0.0
    %449 = vmatprep.mubr.f32.mxu0 0.0
    %450 = vmatmul.mubr.f32.gmra.mrb[0].mxu0 %v383
    %v451 = vpop.f32.mrb[0].mxu0
    %v452 = vadd.f32 %v379, %v451
    %v453 = vpop.f32.mrb[0].mxu0
    %454 = vdwg.mxu0
    %v455 = vmax.f32 %v452, 0.0
    %456 = vset.pattern.permute.xlu0 1
    %457 = vperm.xlu0 %456, %v375
    %v458 = vpop.permute.xlu0 %457
    %v460 = vmul.f32 %v455, %v458
    %v461 = vrot.slane %v460, 4
    %v462 = vadd.f32 %v460, %v461
    %v463 = vrot.slane %v462, 2
    %v464 = vadd.f32 %v462, %v463
    %v465 = vrot.slane %v464, 1
    %v466 = vadd.f32 %v464, %v465
    %v467 = vstv %s40
    %v468 = vadd.f32 %v466, %v467
    %v469 = vmul.f32 %v79, %v468
    %v470 = vstv %s41
    %v471 = vmul.f32 %v59, %v470
    %v472 = vadd.f32 %v469, %v471
    %v473 = vstv %s42
    %v474 = vadd.f32 %v472, %v473
    %v475 = vxor.u32 %v474, 2147483648
    %v476 = vmul.f32 %v475, 1.442695
    %v477 = vpow.pop %v476
    %v478 = vadd.f32 %v477, 1.0
    %v479 = vrcp.pop %v478
    %v480 = vmul.f32 1.0, %v479
    %481 = vst [vmem:[#allocation5] sm:$0x1] %v480
    // Predicated region
    $region30: #{tpu_custom_call.1} parent=1 // pred_check
      _
    $region31: #{tpu_custom_call.1} parent=1 // pred_check_branch
      %483 = sbr.rel (0) target = $region33
    $region32: #{tpu_custom_call.1} parent=1 // pred_region
      %s485 = ssub.s32 16, 16
      %486 = vsyncadd [#allocation3], %s485
      %s488 = sshll.u32 [#allocation5], 4
      %s489 = int_to_ptr.vmem [resolvable:$true] %s488
      %491 = dma.vmem_to_hbm [thread:$0]  %s489, 16, %s6, [#allocation3]
    $region33: #{tpu_custom_call.1} parent=1 // pred_fallthru
      _
    // Predicated region
    $region34: #{tpu_custom_call.1} parent=1 // pred_check
      _
    $region35: #{tpu_custom_call.1} parent=1 // pred_check_branch
      %493 = sbr.rel (0) target = $region37
    $region36: #{tpu_custom_call.1} parent=1 // pred_region
      %494 = dma.done [#allocation3], 16
    $region37: #{tpu_custom_call.1} parent=1 // pred_fallthru
      _
    %495 = vsyncpa [#allocation3], 1
    %496 = vsyncpa [#allocation4], 1

</llo_original>
